<compile_context>
chip_gen: v7x
topology: tpu7x:2x2x1
jax: 0.10.0
libtpu: 0.0.40
codegen_flags: <defaults>
</compile_context>

<pallas_src>
import numpy as np
import jax
import jax.numpy as jnp
from jax.experimental import pallas as pl
from jax.experimental.pallas import tpu as pltpu


def make_dcn_kernel(num_mlp_layers, num_cross_layers):
    """Kernel body for a static layer count. Activations are [TB, feature] (batch on sublanes)."""

    def kernel(x_ref, *rest):
        # rest = [ (wT_i, b_i) * num_mlp_layers,
        #          (cross_w_l [E,1], cross_b_l [1,E]) * num_cross_layers,
        #          wc_dnn [H_last,1], wc_cross [E,1], bc (SMEM 1x1), out_ref [TB,1] ]
        idx = 0
        mlp_params = []
        for _ in range(num_mlp_layers):
            wT = rest[idx][...]        # [H_in, H_out]  (BN already folded in, pre-transposed)
            b = rest[idx + 1][...]     # [1, H_out]
            mlp_params.append((wT, b))
            idx += 2
        cross_params = []
        for _ in range(num_cross_layers):
            cw = rest[idx][...]        # [E, 1]
            cb = rest[idx + 1][...]    # [1, E]
            cross_params.append((cw, cb))
            idx += 2
        wc_d = rest[idx][...]          # [H_last, 1]
        wc_x = rest[idx + 1][...]      # [E, 1]
        bc_ref = rest[idx + 2]         # SMEM (1, 1)
        out_ref = rest[idx + 3]        # [TB, 1]

        x0 = x_ref[...]                # [TB, E]  (batch on sublanes, natural gather layout)

        # ---- deep branch: (Linear+BN folded) -> ReLU, Dropout = identity (eval) ----
        h = x0
        for (wT, b) in mlp_params:
            h = jnp.maximum(
                jnp.dot(h, wT, preferred_element_type=jnp.float32) + b, 0.0)

        # ---- cross branch: x_{l+1} = x0 * (w_l . x_l) + b_l + x_l  (projection on MXU) ----
        xc = x0
        for (cw, cb) in cross_params:
            xw = jnp.dot(xc, cw, preferred_element_type=jnp.float32)   # [TB, 1]
            xc = x0 * xw + cb + xc

        # ---- combine: Linear(cat([dnn, cross], 1))  -> [TB, 1]  (both dots on MXU) ----
        score = (jnp.dot(h, wc_d, preferred_element_type=jnp.float32)
                 + jnp.dot(xc, wc_x, preferred_element_type=jnp.float32)
                 + bc_ref[0, 0])
        out_ref[...] = score

    return kernel


def dcn_retrain_forward(x, params, *, tb=512):
    """x: int32 [B, F] feature indices (globally-offset rows of the embedding table)."""
    emb = params["embedding"]          # [feature_num, D]
    arch = params["arch"]              # [F] float32 0/1
    field_dim = params["field_dim"]    # python list of ints (rows owned by each field)
    mlp_w = params["mlp_w"]            # list of [H_out, H_in]
    mlp_b = params["mlp_b"]            # list of [H_out]
    bn_g, bn_bt = params["bn_gamma"], params["bn_beta"]
    bn_m, bn_v = params["bn_mean"], params["bn_var"]
    cross_w = params["cross_w"]        # [L, E]
    cross_b = params["cross_b"]        # [L, E]
    comb_w = params["combine_w"]       # [1, M_last + E]
    comb_b = params["combine_b"]       # [1]

    B, F = x.shape
    D = emb.shape[1]
    E = F * D
    L = cross_w.shape[0]
    n_mlp = len(mlp_w)

    # --- fold the per-field arch mask into the embedding table rows (done once).
    #     Exact under the standard encoding where field f's indices lie in field f's row
    #     range (the module's field_dim / calc_sparsity bookkeeping assumes exactly this).
    row_mask = jnp.concatenate(
        [jnp.full((int(n),), arch[i], dtype=jnp.float32) for i, n in enumerate(field_dim)])
    emb_f = (emb * row_mask[:, None]).astype(jnp.float32)

    # --- glue: gather + flatten (single fused XLA pass, no mask / no transpose pass) ---
    xe_flat = jnp.take(emb_f, x, axis=0).reshape(B, E).astype(jnp.float32)   # [B, E]

    # --- batch tiling (batch on sublanes; shrink tile for tiny batches) ---
    tb_eff = int(min(tb, max(8, ((B + 7) // 8) * 8)))
    B_pad = ((B + tb_eff - 1) // tb_eff) * tb_eff
    xe_flat = jnp.pad(xe_flat, ((0, B_pad - B), (0, 0)))
    nb = B_pad // tb_eff

    # --- fold eval-mode BatchNorm1d into each Linear (exact); pre-transpose to [In, Out] ---
    eps = 1e-5
    folded = []
    for i in range(n_mlp):
        s = bn_g[i] / jnp.sqrt(bn_v[i] + eps)                       # [H]
        wT_f = (mlp_w[i] * s[:, None]).T.astype(jnp.float32)        # [H_in, H_out]
        b_f = (s * (mlp_b[i] - bn_m[i]) + bn_bt[i]).reshape(1, -1).astype(jnp.float32)
        folded.append((wT_f, b_f))

    m_last = mlp_w[-1].shape[0]
    wc_d_col = comb_w[0, :m_last].reshape(-1, 1).astype(jnp.float32)   # [M_last, 1]
    wc_x_col = comb_w[0, m_last:].reshape(-1, 1).astype(jnp.float32)   # [E, 1]
    bc = comb_b.reshape(1, 1).astype(jnp.float32)

    kernel = make_dcn_kernel(n_mlp, L)

    in_arrays = [xe_flat]
    in_specs = [pl.BlockSpec((tb_eff, E), lambda i: (i, 0))]          # streamed, pipelined
    for (wT_f, b_f) in folded:
        in_arrays += [wT_f, b_f]
        in_specs += [pl.BlockSpec(wT_f.shape, lambda i: (0, 0)),
                     pl.BlockSpec(b_f.shape, lambda i: (0, 0))]
    for l in range(L):
        cw_col = cross_w[l].reshape(-1, 1).astype(jnp.float32)        # [E, 1]
        cb_row = cross_b[l].reshape(1, -1).astype(jnp.float32)        # [1, E]
        in_arrays += [cw_col, cb_row]
        in_specs += [pl.BlockSpec(cw_col.shape, lambda i: (0, 0)),
                     pl.BlockSpec(cb_row.shape, lambda i: (0, 0))]
    in_arrays += [wc_d_col, wc_x_col, bc]
    in_specs += [pl.BlockSpec(wc_d_col.shape, lambda i: (0, 0)),
                 pl.BlockSpec(wc_x_col.shape, lambda i: (0, 0)),
                 pl.BlockSpec(memory_space=pltpu.MemorySpace.SMEM)]

    out = pl.pallas_call(
        kernel,
        out_shape=jax.ShapeDtypeStruct((B_pad, 1), jnp.float32),
        grid=(nb,),
        in_specs=in_specs,
        out_specs=pl.BlockSpec((tb_eff, 1), lambda i: (i, 0)),
        compiler_params=pltpu.CompilerParams(
            dimension_semantics=("parallel",),
            vmem_limit_bytes=32 * 1024 * 1024),
    )(*in_arrays)

    return out[:B, 0]                                                 # .squeeze(1)


def reference_forward(x, params):
    """Pure-JAX reference of the same (eval-mode) math, using the module's column-wise mask."""
    emb, arch = params["embedding"], params["arch"]
    B = x.shape[0]
    xv = jnp.take(emb, x, axis=0)
    xe = xv * arch[None, :, None]
    flat = xe.reshape(B, -1)

    eps = 1e-5
    h = flat
    for i in range(len(params["mlp_w"])):
        h = h @ params["mlp_w"][i].T + params["mlp_b"][i][None, :]
        h = (h - params["bn_mean"][i][None, :]) / jnp.sqrt(params["bn_var"][i][None, :] + eps)
        h = h * params["bn_gamma"][i][None, :] + params["bn_beta"][i][None, :]
        h = jnp.maximum(h, 0.0)   # dropout: identity in eval

    x0 = flat
    xc = flat
    for l in range(params["cross_w"].shape[0]):
        xw = xc @ params["cross_w"][l][:, None]               # [B, 1]
        xc = x0 * xw + params["cross_b"][l][None, :] + xc

    stacked = jnp.concatenate([h, xc], axis=1)
    score = stacked @ params["combine_w"].T + params["combine_b"][None, :]
    return score[:, 0]


def init_params(key, field_dim, latent_dim, mlp_dims, cross_layer_num, arch_raw):
    feature_num = int(sum(field_dim))
    E = len(field_dim) * latent_dim
    keys = list(jax.random.split(key, 64))
    ki = iter(range(64))

    # xavier_uniform_ embedding [feature_num, latent_dim]
    a = float(np.sqrt(6.0 / (feature_num + latent_dim)))
    embedding = jax.random.uniform(keys[next(ki)], (feature_num, latent_dim),
                                   jnp.float32, minval=-a, maxval=a)

    # discretized architecture: arch > 0 -> 1 else 0
    arch = jnp.asarray(np.where(np.asarray(arch_raw) > 0, 1, 0), jnp.float32)

    mlp_w, mlp_b = [], []
    bn_gamma, bn_beta, bn_mean, bn_var = [], [], [], []
    in_dim = E
    for h in mlp_dims:
        mlp_w.append(0.1 * jax.random.normal(keys[next(ki)], (h, in_dim), jnp.float32))
        mlp_b.append(0.1 * jax.random.normal(keys[next(ki)], (h,), jnp.float32))
        bn_gamma.append(jax.random.uniform(keys[next(ki)], (h,), jnp.float32, 0.5, 1.5))
        bn_beta.append(0.1 * jax.random.normal(keys[next(ki)], (h,), jnp.float32))
        bn_mean.append(0.05 * jax.random.normal(keys[next(ki)], (h,), jnp.float32))
        bn_var.append(jax.random.uniform(keys[next(ki)], (h,), jnp.float32, 0.5, 1.5))
        in_dim = h

    cross_w = 0.1 * jax.random.normal(keys[next(ki)], (cross_layer_num, E), jnp.float32)
    cross_b = 0.1 * jax.random.normal(keys[next(ki)], (cross_layer_num, E), jnp.float32)

    combine_w = 0.1 * jax.random.normal(keys[next(ki)], (1, mlp_dims[-1] + E), jnp.float32)
    combine_b = 0.1 * jax.random.normal(keys[next(ki)], (1,), jnp.float32)

    return {
        "embedding": embedding, "arch": arch, "field_dim": list(field_dim),
        "mlp_w": mlp_w, "mlp_b": mlp_b,
        "bn_gamma": bn_gamma, "bn_beta": bn_beta, "bn_mean": bn_mean, "bn_var": bn_var,
        "cross_w": cross_w, "cross_b": cross_b,
        "combine_w": combine_w, "combine_b": combine_b,
    }


def make_inputs(key, batch, field_dim):
    """Per-field indices with standard global offsets (each field draws from its own rows)."""
    F = len(field_dim)
    offsets = np.concatenate([[0], np.cumsum(field_dim)[:-1]]).astype(np.int32)
    cols = []
    for f in range(F):
        key, sub = jax.random.split(key)
        cols.append(jax.random.randint(sub, (batch,), 0, field_dim[f]) + int(offsets[f]))
    return jnp.stack(cols, axis=1).astype(jnp.int32)


if __name__ == "__main__":
    # Small config: 4 fields, latent_dim = 8 (E = 32), mlp_dims = (16, 16), 3 cross layers
    field_dim = [3, 4, 5, 6]                       # feature_num = 18
    latent_dim = 8
    mlp_dims = (16, 16)
    cross_layer_num = 3
    arch_raw = np.array([0.3, -0.2, 0.5, 0.1], dtype=np.float32)

    key = jax.random.PRNGKey(0)
    k_param, k_x1, k_x2, k_x3 = jax.random.split(key, 4)
    params = init_params(k_param, field_dim, latent_dim, mlp_dims, cross_layer_num, arch_raw)

    ok = True
    # 2: tiny batch (single shrunk tile);  260: padding within one tile;  1200: multi-tile grid.
    for kx, batch in ((k_x1, 2), (k_x2, 260), (k_x3, 1200)):
        x = make_inputs(kx, batch, field_dim)
        out = dcn_retrain_forward(x, params)
        out = jax.block_until_ready(out)
        ref = reference_forward(x, params)
        assert out.shape == (batch,)
        ok = ok and bool(jnp.allclose(out, ref, atol=1e-2, rtol=1e-2))

    assert ok
    print("KERNEL_OK")
</pallas_src>

<mosaic_0001>
module attributes {stable_mosaic.version = 11 : i64} {
  func.func @kernel(%arg0: i32, %arg1: memref<8x32xf32, #tpu.memory_space<vmem>>, %arg2: memref<32x16xf32, #tpu.memory_space<vmem>>, %arg3: memref<1x16xf32, #tpu.memory_space<vmem>>, %arg4: memref<16x16xf32, #tpu.memory_space<vmem>>, %arg5: memref<1x16xf32, #tpu.memory_space<vmem>>, %arg6: memref<32x1xf32, #tpu.memory_space<vmem>>, %arg7: memref<1x32xf32, #tpu.memory_space<vmem>>, %arg8: memref<32x1xf32, #tpu.memory_space<vmem>>, %arg9: memref<1x32xf32, #tpu.memory_space<vmem>>, %arg10: memref<32x1xf32, #tpu.memory_space<vmem>>, %arg11: memref<1x32xf32, #tpu.memory_space<vmem>>, %arg12: memref<16x1xf32, #tpu.memory_space<vmem>>, %arg13: memref<32x1xf32, #tpu.memory_space<vmem>>, %arg14: memref<1x1xf32, #tpu.memory_space<smem>>, %arg15: memref<8x1xf32, #tpu.memory_space<vmem>>) attributes {dimension_semantics = [#tpu.dimension_semantics<parallel>], iteration_bounds = array<i64: 1>, scalar_prefetch = 0 : i64, scratch_operands = 0 : i64, tpu.core_type = #tpu.core_type<tc>, window_params = [{transform_indices = @transform_0, window_bounds = array<i64: 8, 32>}, {pipeline_mode = #tpu.pipeline_mode<synchronous>, transform_indices = @transform_1, window_bounds = array<i64: 32, 16>}, {pipeline_mode = #tpu.pipeline_mode<synchronous>, transform_indices = @transform_2, window_bounds = array<i64: 1, 16>}, {pipeline_mode = #tpu.pipeline_mode<synchronous>, transform_indices = @transform_3, window_bounds = array<i64: 16, 16>}, {pipeline_mode = #tpu.pipeline_mode<synchronous>, transform_indices = @transform_4, window_bounds = array<i64: 1, 16>}, {pipeline_mode = #tpu.pipeline_mode<synchronous>, transform_indices = @transform_5, window_bounds = array<i64: 32, 1>}, {pipeline_mode = #tpu.pipeline_mode<synchronous>, transform_indices = @transform_6, window_bounds = array<i64: 1, 32>}, {pipeline_mode = #tpu.pipeline_mode<synchronous>, transform_indices = @transform_7, window_bounds = array<i64: 32, 1>}, {pipeline_mode = #tpu.pipeline_mode<synchronous>, transform_indices = @transform_8, window_bounds = array<i64: 1, 32>}, {pipeline_mode = #tpu.pipeline_mode<synchronous>, transform_indices = @transform_9, window_bounds = array<i64: 32, 1>}, {pipeline_mode = #tpu.pipeline_mode<synchronous>, transform_indices = @transform_10, window_bounds = array<i64: 1, 32>}, {pipeline_mode = #tpu.pipeline_mode<synchronous>, transform_indices = @transform_11, window_bounds = array<i64: 16, 1>}, {pipeline_mode = #tpu.pipeline_mode<synchronous>, transform_indices = @transform_12, window_bounds = array<i64: 32, 1>}, {transform_indices = @transform_13, window_bounds = array<i64: 1, 1>}, {transform_indices = @transform_14, window_bounds = array<i64: 8, 1>}]} {
    %c0 = arith.constant 0 : index
    %c0_0 = arith.constant 0 : index
    %0 = vector.load %arg2[%c0, %c0_0] : memref<32x16xf32, #tpu.memory_space<vmem>>, vector<32x16xf32>
    %c0_1 = arith.constant 0 : index
    %c0_2 = arith.constant 0 : index
    %1 = vector.load %arg3[%c0_1, %c0_2] : memref<1x16xf32, #tpu.memory_space<vmem>>, vector<1x16xf32>
    %c0_3 = arith.constant 0 : index
    %c0_4 = arith.constant 0 : index
    %2 = vector.load %arg4[%c0_3, %c0_4] : memref<16x16xf32, #tpu.memory_space<vmem>>, vector<16x16xf32>
    %c0_5 = arith.constant 0 : index
    %c0_6 = arith.constant 0 : index
    %3 = vector.load %arg5[%c0_5, %c0_6] : memref<1x16xf32, #tpu.memory_space<vmem>>, vector<1x16xf32>
    %c0_7 = arith.constant 0 : index
    %c0_8 = arith.constant 0 : index
    %4 = vector.load %arg6[%c0_7, %c0_8] : memref<32x1xf32, #tpu.memory_space<vmem>>, vector<32x1xf32>
    %c0_9 = arith.constant 0 : index
    %c0_10 = arith.constant 0 : index
    %5 = vector.load %arg7[%c0_9, %c0_10] : memref<1x32xf32, #tpu.memory_space<vmem>>, vector<1x32xf32>
    %c0_11 = arith.constant 0 : index
    %c0_12 = arith.constant 0 : index
    %6 = vector.load %arg8[%c0_11, %c0_12] : memref<32x1xf32, #tpu.memory_space<vmem>>, vector<32x1xf32>
    %c0_13 = arith.constant 0 : index
    %c0_14 = arith.constant 0 : index
    %7 = vector.load %arg9[%c0_13, %c0_14] : memref<1x32xf32, #tpu.memory_space<vmem>>, vector<1x32xf32>
    %c0_15 = arith.constant 0 : index
    %c0_16 = arith.constant 0 : index
    %8 = vector.load %arg10[%c0_15, %c0_16] : memref<32x1xf32, #tpu.memory_space<vmem>>, vector<32x1xf32>
    %c0_17 = arith.constant 0 : index
    %c0_18 = arith.constant 0 : index
    %9 = vector.load %arg11[%c0_17, %c0_18] : memref<1x32xf32, #tpu.memory_space<vmem>>, vector<1x32xf32>
    %c0_19 = arith.constant 0 : index
    %c0_20 = arith.constant 0 : index
    %10 = vector.load %arg12[%c0_19, %c0_20] : memref<16x1xf32, #tpu.memory_space<vmem>>, vector<16x1xf32>
    %c0_21 = arith.constant 0 : index
    %c0_22 = arith.constant 0 : index
    %11 = vector.load %arg13[%c0_21, %c0_22] : memref<32x1xf32, #tpu.memory_space<vmem>>, vector<32x1xf32>
    %c0_23 = arith.constant 0 : index
    %c0_24 = arith.constant 0 : index
    %12 = vector.load %arg1[%c0_23, %c0_24] : memref<8x32xf32, #tpu.memory_space<vmem>>, vector<8x32xf32>
    %cst = arith.constant dense<0.000000e+00> : vector<8x16xf32>
    %13 = tpu.matmul %12, %0, %cst {dimension_numbers = #tpu.dot_dimension_numbers<[1], [0], [0], [1], [0, 0, 1, 1], [], []>} : vector<8x32xf32>, vector<32x16xf32>, vector<8x16xf32> -> vector<8x16xf32>
    %14 = vector.broadcast %1 : vector<1x16xf32> to vector<8x16xf32>
    %15 = arith.addf %13, %14 : vector<8x16xf32>
    %cst_25 = arith.constant 0.000000e+00 : f32
    %16 = vector.broadcast %cst_25 : f32 to vector<8x16xf32>
    %17 = arith.maximumf %15, %16 : vector<8x16xf32>
    %cst_26 = arith.constant dense<0.000000e+00> : vector<8x16xf32>
    %18 = tpu.matmul %17, %2, %cst_26 {dimension_numbers = #tpu.dot_dimension_numbers<[1], [0], [0], [1], [0, 0, 1, 1], [], []>} : vector<8x16xf32>, vector<16x16xf32>, vector<8x16xf32> -> vector<8x16xf32>
    %19 = vector.broadcast %3 : vector<1x16xf32> to vector<8x16xf32>
    %20 = arith.addf %18, %19 : vector<8x16xf32>
    %cst_27 = arith.constant 0.000000e+00 : f32
    %21 = vector.broadcast %cst_27 : f32 to vector<8x16xf32>
    %22 = arith.maximumf %20, %21 : vector<8x16xf32>
    %cst_28 = arith.constant dense<0.000000e+00> : vector<8x1xf32>
    %23 = tpu.matmul %12, %4, %cst_28 {dimension_numbers = #tpu.dot_dimension_numbers<[1], [0], [0], [1], [0, 0, 1, 1], [], []>} : vector<8x32xf32>, vector<32x1xf32>, vector<8x1xf32> -> vector<8x1xf32>
    %24 = vector.broadcast %23 : vector<8x1xf32> to vector<8x32xf32>
    %25 = arith.mulf %12, %24 : vector<8x32xf32>
    %26 = vector.broadcast %5 : vector<1x32xf32> to vector<8x32xf32>
    %27 = arith.addf %25, %26 : vector<8x32xf32>
    %28 = arith.addf %27, %12 : vector<8x32xf32>
    %cst_29 = arith.constant dense<0.000000e+00> : vector<8x1xf32>
    %29 = tpu.matmul %28, %6, %cst_29 {dimension_numbers = #tpu.dot_dimension_numbers<[1], [0], [0], [1], [0, 0, 1, 1], [], []>} : vector<8x32xf32>, vector<32x1xf32>, vector<8x1xf32> -> vector<8x1xf32>
    %30 = vector.broadcast %29 : vector<8x1xf32> to vector<8x32xf32>
    %31 = arith.mulf %12, %30 : vector<8x32xf32>
    %32 = vector.broadcast %7 : vector<1x32xf32> to vector<8x32xf32>
    %33 = arith.addf %31, %32 : vector<8x32xf32>
    %34 = arith.addf %33, %28 : vector<8x32xf32>
    %cst_30 = arith.constant dense<0.000000e+00> : vector<8x1xf32>
    %35 = tpu.matmul %34, %8, %cst_30 {dimension_numbers = #tpu.dot_dimension_numbers<[1], [0], [0], [1], [0, 0, 1, 1], [], []>} : vector<8x32xf32>, vector<32x1xf32>, vector<8x1xf32> -> vector<8x1xf32>
    %36 = vector.broadcast %35 : vector<8x1xf32> to vector<8x32xf32>
    %37 = arith.mulf %12, %36 : vector<8x32xf32>
    %38 = vector.broadcast %9 : vector<1x32xf32> to vector<8x32xf32>
    %39 = arith.addf %37, %38 : vector<8x32xf32>
    %40 = arith.addf %39, %34 : vector<8x32xf32>
    %cst_31 = arith.constant dense<0.000000e+00> : vector<8x1xf32>
    %41 = tpu.matmul %22, %10, %cst_31 {dimension_numbers = #tpu.dot_dimension_numbers<[1], [0], [0], [1], [0, 0, 1, 1], [], []>} : vector<8x16xf32>, vector<16x1xf32>, vector<8x1xf32> -> vector<8x1xf32>
    %cst_32 = arith.constant dense<0.000000e+00> : vector<8x1xf32>
    %42 = tpu.matmul %40, %11, %cst_32 {dimension_numbers = #tpu.dot_dimension_numbers<[1], [0], [0], [1], [0, 0, 1, 1], [], []>} : vector<8x32xf32>, vector<32x1xf32>, vector<8x1xf32> -> vector<8x1xf32>
    %43 = arith.addf %41, %42 : vector<8x1xf32>
    %c0_33 = arith.constant 0 : index
    %c0_34 = arith.constant 0 : index
    %44 = memref.load %arg14[%c0_33, %c0_34] : memref<1x1xf32, #tpu.memory_space<smem>>
    %45 = vector.broadcast %44 : f32 to vector<8x1xf32>
    %46 = arith.addf %43, %45 : vector<8x1xf32>
    %c0_35 = arith.constant 0 : index
    %c0_36 = arith.constant 0 : index
    %47 = vector.load %arg15[%c0_35, %c0_36] : memref<8x1xf32, #tpu.memory_space<vmem>>, vector<8x1xf32>
    tpu.vector_store %arg15[%c0_35, %c0_36], %46 {strides = array<i32>} : memref<8x1xf32, #tpu.memory_space<vmem>>, vector<8x1xf32>,
    return
  }
  func.func @transform_0(%arg0: i32) -> (i32, i32) {
    %c0_i32 = arith.constant 0 : i32
    %c0_i32_0 = arith.constant 0 : i32
    return %arg0, %c0_i32 : i32, i32
  }
  func.func @transform_1(%arg0: i32) -> (i32, i32) {
    %c0_i32 = arith.constant 0 : i32
    %c0_i32_0 = arith.constant 0 : i32
    %c0_i32_1 = arith.constant 0 : i32
    return %c0_i32, %c0_i32_0 : i32, i32
  }
  func.func @transform_2(%arg0: i32) -> (i32, i32) {
    %c0_i32 = arith.constant 0 : i32
    %c0_i32_0 = arith.constant 0 : i32
    %c0_i32_1 = arith.constant 0 : i32
    return %c0_i32, %c0_i32_0 : i32, i32
  }
  func.func @transform_3(%arg0: i32) -> (i32, i32) {
    %c0_i32 = arith.constant 0 : i32
    %c0_i32_0 = arith.constant 0 : i32
    %c0_i32_1 = arith.constant 0 : i32
    return %c0_i32, %c0_i32_0 : i32, i32
  }
  func.func @transform_4(%arg0: i32) -> (i32, i32) {
    %c0_i32 = arith.constant 0 : i32
    %c0_i32_0 = arith.constant 0 : i32
    %c0_i32_1 = arith.constant 0 : i32
    return %c0_i32, %c0_i32_0 : i32, i32
  }
  func.func @transform_5(%arg0: i32) -> (i32, i32) {
    %c0_i32 = arith.constant 0 : i32
    %c0_i32_0 = arith.constant 0 : i32
    %c0_i32_1 = arith.constant 0 : i32
    return %c0_i32, %c0_i32_0 : i32, i32
  }
  func.func @transform_6(%arg0: i32) -> (i32, i32) {
    %c0_i32 = arith.constant 0 : i32
    %c0_i32_0 = arith.constant 0 : i32
    %c0_i32_1 = arith.constant 0 : i32
    return %c0_i32, %c0_i32_0 : i32, i32
  }
  func.func @transform_7(%arg0: i32) -> (i32, i32) {
    %c0_i32 = arith.constant 0 : i32
    %c0_i32_0 = arith.constant 0 : i32
    %c0_i32_1 = arith.constant 0 : i32
    return %c0_i32, %c0_i32_0 : i32, i32
  }
  func.func @transform_8(%arg0: i32) -> (i32, i32) {
    %c0_i32 = arith.constant 0 : i32
    %c0_i32_0 = arith.constant 0 : i32
    %c0_i32_1 = arith.constant 0 : i32
    return %c0_i32, %c0_i32_0 : i32, i32
  }
  func.func @transform_9(%arg0: i32) -> (i32, i32) {
    %c0_i32 = arith.constant 0 : i32
    %c0_i32_0 = arith.constant 0 : i32
    %c0_i32_1 = arith.constant 0 : i32
    return %c0_i32, %c0_i32_0 : i32, i32
  }
  func.func @transform_10(%arg0: i32) -> (i32, i32) {
    %c0_i32 = arith.constant 0 : i32
    %c0_i32_0 = arith.constant 0 : i32
    %c0_i32_1 = arith.constant 0 : i32
    return %c0_i32, %c0_i32_0 : i32, i32
  }
  func.func @transform_11(%arg0: i32) -> (i32, i32) {
    %c0_i32 = arith.constant 0 : i32
    %c0_i32_0 = arith.constant 0 : i32
    %c0_i32_1 = arith.constant 0 : i32
    return %c0_i32, %c0_i32_0 : i32, i32
  }
  func.func @transform_12(%arg0: i32) -> (i32, i32) {
    %c0_i32 = arith.constant 0 : i32
    %c0_i32_0 = arith.constant 0 : i32
    %c0_i32_1 = arith.constant 0 : i32
    return %c0_i32, %c0_i32_0 : i32, i32
  }
  func.func @transform_13(%arg0: i32) -> (i32, i32) {
    %c0_i32 = arith.constant 0 : i32
    %c0_i32_0 = arith.constant 0 : i32
    %c0_i32_1 = arith.constant 0 : i32
    return %c0_i32, %c0_i32_0 : i32, i32
  }
  func.func @transform_14(%arg0: i32) -> (i32, i32) {
    %c0_i32 = arith.constant 0 : i32
    %c0_i32_0 = arith.constant 0 : i32
    return %arg0, %c0_i32 : i32, i32
  }
}

</mosaic_0001>

<llo_original>
// kernel: tpu_custom_call.1
$region0: #{tpu_custom_call.1}
  #allocation0 [shape = 'u32[]', space=smem, size = 0x4, offset = 0x4, fixed_abs, tag = 'smem constant byte address 0x4 - core index']
  #allocation1 [shape = 'u32[144,128]{1,0:T(1,128)}', space=vmem, size = 0x12000, scoped, tag = 'internal scratch']
  #allocation2 [shape = 'f32[1,1]{1,0:T(1,128)S(6)}', space=smem, size = 0x200, scoped, tag = 'scoped memory for tpu_custom_call.1']
  %s0 = inlined_call_operand.vmem [shape: f32[8,32], index: 0, kind: input, shape index: {}]
  %s1 = inlined_call_operand.vmem [shape: f32[32,16], index: 1, kind: input, shape index: {}]
  %s2 = inlined_call_operand.vmem [shape: f32[1,16], index: 2, kind: input, shape index: {}]
  %s3 = inlined_call_operand.vmem [shape: f32[16,16], index: 3, kind: input, shape index: {}]
  %s4 = inlined_call_operand.vmem [shape: f32[1,16], index: 4, kind: input, shape index: {}]
  %s5 = inlined_call_operand.vmem [shape: f32[32,1], index: 5, kind: input, shape index: {}]
  %s6 = inlined_call_operand.vmem [shape: f32[1,32], index: 6, kind: input, shape index: {}]
  %s7 = inlined_call_operand.vmem [shape: f32[32,1], index: 7, kind: input, shape index: {}]
  %s8 = inlined_call_operand.vmem [shape: f32[1,32], index: 8, kind: input, shape index: {}]
  %s9 = inlined_call_operand.vmem [shape: f32[32,1], index: 9, kind: input, shape index: {}]
  %s10 = inlined_call_operand.vmem [shape: f32[1,32], index: 10, kind: input, shape index: {}]
  %s11 = inlined_call_operand.vmem [shape: f32[16,1], index: 11, kind: input, shape index: {}]
  %s12 = inlined_call_operand.vmem [shape: f32[32,1], index: 12, kind: input, shape index: {}]
  %s13 = inlined_call_operand.<no memory space> [shape: f32[1,1], index: 13, kind: input, shape index: {}]
  %s14 = inlined_call_operand.vmem [shape: f32[8,1], index: 14, kind: output, shape index: {}]
  %s15 = sld [smem:[#allocation0]]
  $region66: #{tpu_custom_call.1} parent=0
    _
  %s17 = ssub.s32 1, %s15
  %s18 = scalar_select 0, %s17, %s15
  %19 = sst [smem:[#allocation2]] %s13
  // Predicated region
  $region2: #{tpu_custom_call.1} parent=0 // pred_check
    _
  $region3: #{tpu_custom_call.1} parent=0 // pred_check_branch
    %21 = sbr.rel (0) target = $region5
  $region4: #{tpu_custom_call.1} parent=0 // pred_region
    _
  $region5: #{tpu_custom_call.1} parent=0 // pred_fallthru
    _
  // Predicated region
  $region6: #{tpu_custom_call.1} parent=0 // pred_check
    _
  $region7: #{tpu_custom_call.1} parent=0 // pred_check_branch
    %23 = sbr.rel (0) target = $region9
  $region8: #{tpu_custom_call.1} parent=0 // pred_region
    _
  $region9: #{tpu_custom_call.1} parent=0 // pred_fallthru
    _
  // Predicated region
  $region10: #{tpu_custom_call.1} parent=0 // pred_check
    _
  $region11: #{tpu_custom_call.1} parent=0 // pred_check_branch
    %25 = sbr.rel (0) target = $region13
  $region12: #{tpu_custom_call.1} parent=0 // pred_region
    _
  $region13: #{tpu_custom_call.1} parent=0 // pred_fallthru
    _
  // Predicated region
  $region14: #{tpu_custom_call.1} parent=0 // pred_check
    _
  $region15: #{tpu_custom_call.1} parent=0 // pred_check_branch
    %27 = sbr.rel (0) target = $region17
  $region16: #{tpu_custom_call.1} parent=0 // pred_region
    _
  $region17: #{tpu_custom_call.1} parent=0 // pred_fallthru
    _
  // Predicated region
  $region18: #{tpu_custom_call.1} parent=0 // pred_check
    _
  $region19: #{tpu_custom_call.1} parent=0 // pred_check_branch
    %29 = sbr.rel (0) target = $region21
  $region20: #{tpu_custom_call.1} parent=0 // pred_region
    _
  $region21: #{tpu_custom_call.1} parent=0 // pred_fallthru
    _
  // Predicated region
  $region22: #{tpu_custom_call.1} parent=0 // pred_check
    _
  $region23: #{tpu_custom_call.1} parent=0 // pred_check_branch
    %31 = sbr.rel (0) target = $region25
  $region24: #{tpu_custom_call.1} parent=0 // pred_region
    _
  $region25: #{tpu_custom_call.1} parent=0 // pred_fallthru
    _
  // Predicated region
  $region26: #{tpu_custom_call.1} parent=0 // pred_check
    _
  $region27: #{tpu_custom_call.1} parent=0 // pred_check_branch
    %33 = sbr.rel (0) target = $region29
  $region28: #{tpu_custom_call.1} parent=0 // pred_region
    _
  $region29: #{tpu_custom_call.1} parent=0 // pred_fallthru
    _
  // Predicated region
  $region30: #{tpu_custom_call.1} parent=0 // pred_check
    _
  $region31: #{tpu_custom_call.1} parent=0 // pred_check_branch
    %35 = sbr.rel (0) target = $region33
  $region32: #{tpu_custom_call.1} parent=0 // pred_region
    _
  $region33: #{tpu_custom_call.1} parent=0 // pred_fallthru
    _
  // Predicated region
  $region34: #{tpu_custom_call.1} parent=0 // pred_check
    _
  $region35: #{tpu_custom_call.1} parent=0 // pred_check_branch
    %37 = sbr.rel (0) target = $region37
  $region36: #{tpu_custom_call.1} parent=0 // pred_region
    _
  $region37: #{tpu_custom_call.1} parent=0 // pred_fallthru
    _
  // Predicated region
  $region38: #{tpu_custom_call.1} parent=0 // pred_check
    _
  $region39: #{tpu_custom_call.1} parent=0 // pred_check_branch
    %39 = sbr.rel (0) target = $region41
  $region40: #{tpu_custom_call.1} parent=0 // pred_region
    _
  $region41: #{tpu_custom_call.1} parent=0 // pred_fallthru
    _
  // Predicated region
  $region42: #{tpu_custom_call.1} parent=0 // pred_check
    _
  $region43: #{tpu_custom_call.1} parent=0 // pred_check_branch
    %41 = sbr.rel (0) target = $region45
  $region44: #{tpu_custom_call.1} parent=0 // pred_region
    _
  $region45: #{tpu_custom_call.1} parent=0 // pred_fallthru
    _
  // Predicated region
  $region46: #{tpu_custom_call.1} parent=0 // pred_check
    _
  $region47: #{tpu_custom_call.1} parent=0 // pred_check_branch
    %43 = sbr.rel (0) target = $region49
  $region48: #{tpu_custom_call.1} parent=0 // pred_region
    _
  $region49: #{tpu_custom_call.1} parent=0 // pred_fallthru
    _
  // Predicated region
  $region50: #{tpu_custom_call.1} parent=0 // pred_check
    _
  $region51: #{tpu_custom_call.1} parent=0 // pred_check_branch
    %45 = sbr.rel (0) target = $region53
  $region52: #{tpu_custom_call.1} parent=0 // pred_region
    _
  $region53: #{tpu_custom_call.1} parent=0 // pred_fallthru
    _
  // Predicated region
  $region54: #{tpu_custom_call.1} parent=0 // pred_check
    _
  $region55: #{tpu_custom_call.1} parent=0 // pred_check_branch
    %47 = sbr.rel (0) target = $region57
  $region56: #{tpu_custom_call.1} parent=0 // pred_region
    _
  $region57: #{tpu_custom_call.1} parent=0 // pred_fallthru
    _
  %v48 = vld [vmem:[%s1] sm:$0xff]
  %v49 = vld [vmem:[%s1 + $0x8] sm:$0xff]
  %v50 = vld [vmem:[%s1 + $0x10] sm:$0xff]
  %v51 = vld [vmem:[%s1 + $0x18] sm:$0xff]
  %v52 = vld [vmem:[%s2] sm:$0x1]
  %v53 = vld [vmem:[%s3] sm:$0xff]
  %v54 = vld [vmem:[%s3 + $0x8] sm:$0xff]
  %v55 = vld [vmem:[%s4] sm:$0x1]
  %v56 = vld [vmem:[%s5] sm:$0xff]
  %v57 = vld [vmem:[%s5 + $0x8] sm:$0xff]
  %v58 = vld [vmem:[%s5 + $0x10] sm:$0xff]
  %v59 = vld [vmem:[%s5 + $0x18] sm:$0xff]
  %v60 = vld [vmem:[%s6] sm:$0x1]
  %v61 = vld [vmem:[%s7] sm:$0xff]
  %v62 = vld [vmem:[%s7 + $0x8] sm:$0xff]
  %v63 = vld [vmem:[%s7 + $0x10] sm:$0xff]
  %v64 = vld [vmem:[%s7 + $0x18] sm:$0xff]
  %v65 = vld [vmem:[%s8] sm:$0x1]
  %v66 = vld [vmem:[%s9] sm:$0xff]
  %v67 = vld [vmem:[%s9 + $0x8] sm:$0xff]
  %v68 = vld [vmem:[%s9 + $0x10] sm:$0xff]
  %v69 = vld [vmem:[%s9 + $0x18] sm:$0xff]
  %v70 = vld [vmem:[%s10] sm:$0x1]
  %v71 = vld [vmem:[%s11] sm:$0xff]
  %v72 = vld [vmem:[%s11 + $0x8] sm:$0xff]
  %v73 = vld [vmem:[%s12] sm:$0xff]
  %v74 = vld [vmem:[%s12 + $0x8] sm:$0xff]
  %v75 = vld [vmem:[%s12 + $0x10] sm:$0xff]
  %v76 = vld [vmem:[%s12 + $0x18] sm:$0xff]
  %v77 = vld [vmem:[%s0] sm:$0xff]
  %v79 = vlaneseq
  %v80 = vshrl.u32 %v79, 7
  %v81 = vsub.s32 0, %v80
  %v82 = vrot.slane %v52, %v81
  %vm84 = vcmask 261120
  %v86 = vsel %vm84, %v77, 0
  %88 = vmatprep.subr.mxu0 0.0
  %89 = vmatpush1.msra.mxu0 %v48
  %90 = vmatprep.subr.mxu0 0.0
  %91 = vmatpush1.msra.mxu0 %v49
  %92 = vmatprep.subr.mxu0 0.0
  %93 = vmatpush1.msra.mxu0 %v50
  %94 = vmatprep.subr.mxu0 0.0
  %95 = vmatpush1.msra.mxu0 %v51
  %96 = vmatprep.subr.mxu0 0.0
  %97 = vmatpush1.msra.mxu0 0.0
  %98 = vmatprep.subr.mxu0 0.0
  %99 = vmatpush1.msra.mxu0 0.0
  %100 = vmatprep.subr.mxu0 0.0
  %101 = vmatpush1.msra.mxu0 0.0
  %102 = vmatprep.subr.mxu0 0.0
  %103 = vmatpush1.msra.mxu0 0.0
  %104 = vmatprep.subr.mxu0 0.0
  %105 = vmatpush1.msra.mxu0 0.0
  %106 = vmatprep.subr.mxu0 0.0
  %107 = vmatpush1.msra.mxu0 0.0
  %108 = vmatprep.subr.mxu0 0.0
  %109 = vmatpush1.msra.mxu0 0.0
  %110 = vmatprep.subr.mxu0 0.0
  %111 = vmatpush1.msra.mxu0 0.0
  %112 = vmatprep.subr.mxu0 0.0
  %113 = vmatpush1.msra.mxu0 0.0
  %114 = vmatprep.subr.mxu0 0.0
  %115 = vmatpush1.msra.mxu0 0.0
  %116 = vmatprep.subr.mxu0 0.0
  %117 = vmatpush1.msra.mxu0 0.0
  %118 = vmatprep.subr.mxu0 0.0
  %119 = vmatpush1.msra.mxu0 0.0
  %120 = vmatprep.subr.mxu0 0.0
  %121 = vmatpush1.msra.mxu0 0.0
  %122 = vmatprep.subr.mxu0 0.0
  %123 = vmatpush1.msra.mxu0 0.0
  %124 = vmatprep.subr.mxu0 0.0
  %125 = vmatpush1.msra.mxu0 0.0
  %126 = vmatprep.subr.mxu0 0.0
  %127 = vmatpush1.msra.mxu0 0.0
  %128 = vmatprep.subr.mxu0 0.0
  %129 = vmatpush1.msra.mxu0 0.0
  %130 = vmatprep.subr.mxu0 0.0
  %131 = vmatpush1.msra.mxu0 0.0
  %132 = vmatprep.subr.mxu0 0.0
  %133 = vmatpush1.msra.mxu0 0.0
  %134 = vmatprep.subr.mxu0 0.0
  %135 = vmatpush1.msra.mxu0 0.0
  %136 = vmatprep.subr.mxu0 0.0
  %137 = vmatpush1.msra.mxu0 0.0
  %138 = vmatprep.subr.mxu0 0.0
  %139 = vmatpush1.msra.mxu0 0.0
  %140 = vmatprep.subr.mxu0 0.0
  %141 = vmatpush1.msra.mxu0 0.0
  %142 = vmatprep.subr.mxu0 0.0
  %143 = vmatpush1.msra.mxu0 0.0
  %144 = vmatprep.subr.mxu0 0.0
  %145 = vmatpush1.msra.mxu0 0.0
  %146 = vmatprep.subr.mxu0 0.0
  %147 = vmatpush1.msra.mxu0 0.0
  %148 = vmatprep.subr.mxu0 0.0
  %149 = vmatpush1.msra.mxu0 0.0
  %150 = vmatprep.subr.mxu0 0.0
  %151 = vmatpush1.msra.mxu0 0.0
  %152 = vmatprep.mubr.f32.mxu0 0.0
  %153 = vmatmul.mubr.f32.gmra.mrb[0].mxu0 %v86
  %v154 = vpop.f32.mrb[0].mxu0
  %v155 = vadd.f32 %v82, %v154
  %v156 = vpop.f32.mrb[0].mxu0
  %157 = vdwg.mxu0
  %v158 = vmax.f32 %v155, 0.0
  %v160 = vlaneseq
  %v161 = vshrl.u32 %v160, 7
  %v162 = vsub.s32 0, %v161
  %v163 = vrot.slane %v55, %v162
  %vm165 = vcmask 130048
  %v167 = vsel %vm165, %v158, 0
  %169 = vmatprep.subr.mxu0 0.0
  %170 = vmatpush1.msra.mxu0 %v53
  %171 = vmatprep.subr.mxu0 0.0
  %172 = vmatpush1.msra.mxu0 %v54
  %173 = vmatprep.subr.mxu0 0.0
  %174 = vmatpush1.msra.mxu0 0.0
  %175 = vmatprep.subr.mxu0 0.0
  %176 = vmatpush1.msra.mxu0 0.0
  %177 = vmatprep.subr.mxu0 0.0
  %178 = vmatpush1.msra.mxu0 0.0
  %179 = vmatprep.subr.mxu0 0.0
  %180 = vmatpush1.msra.mxu0 0.0
  %181 = vmatprep.subr.mxu0 0.0
  %182 = vmatpush1.msra.mxu0 0.0
  %183 = vmatprep.subr.mxu0 0.0
  %184 = vmatpush1.msra.mxu0 0.0
  %185 = vmatprep.subr.mxu0 0.0
  %186 = vmatpush1.msra.mxu0 0.0
  %187 = vmatprep.subr.mxu0 0.0
  %188 = vmatpush1.msra.mxu0 0.0
  %189 = vmatprep.subr.mxu0 0.0
  %190 = vmatpush1.msra.mxu0 0.0
  %191 = vmatprep.subr.mxu0 0.0
  %192 = vmatpush1.msra.mxu0 0.0
  %193 = vmatprep.subr.mxu0 0.0
  %194 = vmatpush1.msra.mxu0 0.0
  %195 = vmatprep.subr.mxu0 0.0
  %196 = vmatpush1.msra.mxu0 0.0
  %197 = vmatprep.subr.mxu0 0.0
  %198 = vmatpush1.msra.mxu0 0.0
  %199 = vmatprep.subr.mxu0 0.0
  %200 = vmatpush1.msra.mxu0 0.0
  %201 = vmatprep.subr.mxu0 0.0
  %202 = vmatpush1.msra.mxu0 0.0
  %203 = vmatprep.subr.mxu0 0.0
  %204 = vmatpush1.msra.mxu0 0.0
  %205 = vmatprep.subr.mxu0 0.0
  %206 = vmatpush1.msra.mxu0 0.0
  %207 = vmatprep.subr.mxu0 0.0
  %208 = vmatpush1.msra.mxu0 0.0
  %209 = vmatprep.subr.mxu0 0.0
  %210 = vmatpush1.msra.mxu0 0.0
  %211 = vmatprep.subr.mxu0 0.0
  %212 = vmatpush1.msra.mxu0 0.0
  %213 = vmatprep.subr.mxu0 0.0
  %214 = vmatpush1.msra.mxu0 0.0
  %215 = vmatprep.subr.mxu0 0.0
  %216 = vmatpush1.msra.mxu0 0.0
  %217 = vmatprep.subr.mxu0 0.0
  %218 = vmatpush1.msra.mxu0 0.0
  %219 = vmatprep.subr.mxu0 0.0
  %220 = vmatpush1.msra.mxu0 0.0
  %221 = vmatprep.subr.mxu0 0.0
  %222 = vmatpush1.msra.mxu0 0.0
  %223 = vmatprep.subr.mxu0 0.0
  %224 = vmatpush1.msra.mxu0 0.0
  %225 = vmatprep.subr.mxu0 0.0
  %226 = vmatpush1.msra.mxu0 0.0
  %227 = vmatprep.subr.mxu0 0.0
  %228 = vmatpush1.msra.mxu0 0.0
  %229 = vmatprep.subr.mxu0 0.0
  %230 = vmatpush1.msra.mxu0 0.0
  %231 = vmatprep.subr.mxu0 0.0
  %232 = vmatpush1.msra.mxu0 0.0
  %233 = vmatprep.mubr.f32.mxu0 0.0
  %234 = vmatmul.mubr.f32.gmra.mrb[0].mxu0 %v167
  %v235 = vpop.f32.mrb[0].mxu0
  %v236 = vadd.f32 %v163, %v235
  %v237 = vpop.f32.mrb[0].mxu0
  %238 = vdwg.mxu0
  %v239 = vmax.f32 %v236, 0.0
  %240 = vmatprep.subr.mxu0 0.0
  %241 = vmatpush1.msra.mxu0 %v56
  %242 = vmatprep.subr.mxu0 0.0
  %243 = vmatpush1.msra.mxu0 %v57
  %244 = vmatprep.subr.mxu0 0.0
  %245 = vmatpush1.msra.mxu0 %v58
  %246 = vmatprep.subr.mxu0 0.0
  %247 = vmatpush1.msra.mxu0 %v59
  %248 = vmatprep.subr.mxu0 0.0
  %249 = vmatpush1.msra.mxu0 0.0
  %250 = vmatprep.subr.mxu0 0.0
  %251 = vmatpush1.msra.mxu0 0.0
  %252 = vmatprep.subr.mxu0 0.0
  %253 = vmatpush1.msra.mxu0 0.0
  %254 = vmatprep.subr.mxu0 0.0
  %255 = vmatpush1.msra.mxu0 0.0
  %256 = vmatprep.subr.mxu0 0.0
  %257 = vmatpush1.msra.mxu0 0.0
  %258 = vmatprep.subr.mxu0 0.0
  %259 = vmatpush1.msra.mxu0 0.0
  %260 = vmatprep.subr.mxu0 0.0
  %261 = vmatpush1.msra.mxu0 0.0
  %262 = vmatprep.subr.mxu0 0.0
  %263 = vmatpush1.msra.mxu0 0.0
  %264 = vmatprep.subr.mxu0 0.0
  %265 = vmatpush1.msra.mxu0 0.0
  %266 = vmatprep.subr.mxu0 0.0
  %267 = vmatpush1.msra.mxu0 0.0
  %268 = vmatprep.subr.mxu0 0.0
  %269 = vmatpush1.msra.mxu0 0.0
  %270 = vmatprep.subr.mxu0 0.0
  %271 = vmatpush1.msra.mxu0 0.0
  %272 = vmatprep.subr.mxu0 0.0
  %273 = vmatpush1.msra.mxu0 0.0
  %274 = vmatprep.subr.mxu0 0.0
  %275 = vmatpush1.msra.mxu0 0.0
  %276 = vmatprep.subr.mxu0 0.0
  %277 = vmatpush1.msra.mxu0 0.0
  %278 = vmatprep.subr.mxu0 0.0
  %279 = vmatpush1.msra.mxu0 0.0
  %280 = vmatprep.subr.mxu0 0.0
  %281 = vmatpush1.msra.mxu0 0.0
  %282 = vmatprep.subr.mxu0 0.0
  %283 = vmatpush1.msra.mxu0 0.0
  %284 = vmatprep.subr.mxu0 0.0
  %285 = vmatpush1.msra.mxu0 0.0
  %286 = vmatprep.subr.mxu0 0.0
  %287 = vmatpush1.msra.mxu0 0.0
  %288 = vmatprep.subr.mxu0 0.0
  %289 = vmatpush1.msra.mxu0 0.0
  %290 = vmatprep.subr.mxu0 0.0
  %291 = vmatpush1.msra.mxu0 0.0
  %292 = vmatprep.subr.mxu0 0.0
  %293 = vmatpush1.msra.mxu0 0.0
  %294 = vmatprep.subr.mxu0 0.0
  %295 = vmatpush1.msra.mxu0 0.0
  %296 = vmatprep.subr.mxu0 0.0
  %297 = vmatpush1.msra.mxu0 0.0
  %298 = vmatprep.subr.mxu0 0.0
  %299 = vmatpush1.msra.mxu0 0.0
  %300 = vmatprep.subr.mxu0 0.0
  %301 = vmatpush1.msra.mxu0 0.0
  %302 = vmatprep.subr.mxu0 0.0
  %303 = vmatpush1.msra.mxu0 0.0
  %304 = vmatprep.mubr.f32.mxu0 0.0
  %305 = vmatmul.mubr.f32.gmra.mrb[0].mxu0 %v86
  %v306 = vpop.f32.mrb[0].mxu0
  %v307 = vadd.f32 0.0, %v306
  %v308 = vpop.f32.mrb[0].mxu0
  %309 = vdwg.mxu0
  %311 = vset.pattern.permute.xlu0 0
  %312 = vperm.xlu0 %311, %v307
  %v313 = vpop.permute.xlu0 %312
  %v315 = vmul.f32 %v77, %v313
  %v317 = vlaneseq
  %v318 = vshrl.u32 %v317, 7
  %v319 = vsub.s32 0, %v318
  %v320 = vrot.slane %v60, %v319
  %v322 = vadd.f32 %v315, %v320
  %v323 = vadd.f32 %v322, %v77
  %v325 = vsel %vm84, %v323, 0
  %327 = vmatprep.subr.mxu0 0.0
  %328 = vmatpush1.msra.mxu0 %v61
  %329 = vmatprep.subr.mxu0 0.0
  %330 = vmatpush1.msra.mxu0 %v62
  %331 = vmatprep.subr.mxu0 0.0
  %332 = vmatpush1.msra.mxu0 %v63
  %333 = vmatprep.subr.mxu0 0.0
  %334 = vmatpush1.msra.mxu0 %v64
  %335 = vmatprep.subr.mxu0 0.0
  %336 = vmatpush1.msra.mxu0 0.0
  %337 = vmatprep.subr.mxu0 0.0
  %338 = vmatpush1.msra.mxu0 0.0
  %339 = vmatprep.subr.mxu0 0.0
  %340 = vmatpush1.msra.mxu0 0.0
  %341 = vmatprep.subr.mxu0 0.0
  %342 = vmatpush1.msra.mxu0 0.0
  %343 = vmatprep.subr.mxu0 0.0
  %344 = vmatpush1.msra.mxu0 0.0
  %345 = vmatprep.subr.mxu0 0.0
  %346 = vmatpush1.msra.mxu0 0.0
  %347 = vmatprep.subr.mxu0 0.0
  %348 = vmatpush1.msra.mxu0 0.0
  %349 = vmatprep.subr.mxu0 0.0
  %350 = vmatpush1.msra.mxu0 0.0
  %351 = vmatprep.subr.mxu0 0.0
  %352 = vmatpush1.msra.mxu0 0.0
  %353 = vmatprep.subr.mxu0 0.0
  %354 = vmatpush1.msra.mxu0 0.0
  %355 = vmatprep.subr.mxu0 0.0
  %356 = vmatpush1.msra.mxu0 0.0
  %357 = vmatprep.subr.mxu0 0.0
  %358 = vmatpush1.msra.mxu0 0.0
  %359 = vmatprep.subr.mxu0 0.0
  %360 = vmatpush1.msra.mxu0 0.0
  %361 = vmatprep.subr.mxu0 0.0
  %362 = vmatpush1.msra.mxu0 0.0
  %363 = vmatprep.subr.mxu0 0.0
  %364 = vmatpush1.msra.mxu0 0.0
  %365 = vmatprep.subr.mxu0 0.0
  %366 = vmatpush1.msra.mxu0 0.0
  %367 = vmatprep.subr.mxu0 0.0
  %368 = vmatpush1.msra.mxu0 0.0
  %369 = vmatprep.subr.mxu0 0.0
  %370 = vmatpush1.msra.mxu0 0.0
  %371 = vmatprep.subr.mxu0 0.0
  %372 = vmatpush1.msra.mxu0 0.0
  %373 = vmatprep.subr.mxu0 0.0
  %374 = vmatpush1.msra.mxu0 0.0
  %375 = vmatprep.subr.mxu0 0.0
  %376 = vmatpush1.msra.mxu0 0.0
  %377 = vmatprep.subr.mxu0 0.0
  %378 = vmatpush1.msra.mxu0 0.0
  %379 = vmatprep.subr.mxu0 0.0
  %380 = vmatpush1.msra.mxu0 0.0
  %381 = vmatprep.subr.mxu0 0.0
  %382 = vmatpush1.msra.mxu0 0.0
  %383 = vmatprep.subr.mxu0 0.0
  %384 = vmatpush1.msra.mxu0 0.0
  %385 = vmatprep.subr.mxu0 0.0
  %386 = vmatpush1.msra.mxu0 0.0
  %387 = vmatprep.subr.mxu0 0.0
  %388 = vmatpush1.msra.mxu0 0.0
  %389 = vmatprep.subr.mxu0 0.0
  %390 = vmatpush1.msra.mxu0 0.0
  %391 = vmatprep.mubr.f32.mxu0 0.0
  %392 = vmatmul.mubr.f32.gmra.mrb[0].mxu0 %v325
  %v393 = vpop.f32.mrb[0].mxu0
  %v394 = vadd.f32 0.0, %v393
  %v395 = vpop.f32.mrb[0].mxu0
  %396 = vdwg.mxu0
  %398 = vset.pattern.permute.xlu0 0
  %399 = vperm.xlu0 %398, %v394
  %v400 = vpop.permute.xlu0 %399
  %v402 = vmul.f32 %v77, %v400
  %v404 = vlaneseq
  %v405 = vshrl.u32 %v404, 7
  %v406 = vsub.s32 0, %v405
  %v407 = vrot.slane %v65, %v406
  %v409 = vadd.f32 %v402, %v407
  %v410 = vadd.f32 %v409, %v323
  %v412 = vsel %vm84, %v410, 0
  %414 = vmatprep.subr.mxu0 0.0
  %415 = vmatpush1.msra.mxu0 %v66
  %416 = vmatprep.subr.mxu0 0.0
  %417 = vmatpush1.msra.mxu0 %v67
  %418 = vmatprep.subr.mxu0 0.0
  %419 = vmatpush1.msra.mxu0 %v68
  %420 = vmatprep.subr.mxu0 0.0
  %421 = vmatpush1.msra.mxu0 %v69
  %422 = vmatprep.subr.mxu0 0.0
  %423 = vmatpush1.msra.mxu0 0.0
  %424 = vmatprep.subr.mxu0 0.0
  %425 = vmatpush1.msra.mxu0 0.0
  %426 = vmatprep.subr.mxu0 0.0
  %427 = vmatpush1.msra.mxu0 0.0
  %428 = vmatprep.subr.mxu0 0.0
  %429 = vmatpush1.msra.mxu0 0.0
  %430 = vmatprep.subr.mxu0 0.0
  %431 = vmatpush1.msra.mxu0 0.0
  %432 = vmatprep.subr.mxu0 0.0
  %433 = vmatpush1.msra.mxu0 0.0
  %434 = vmatprep.subr.mxu0 0.0
  %435 = vmatpush1.msra.mxu0 0.0
  %436 = vmatprep.subr.mxu0 0.0
  %437 = vmatpush1.msra.mxu0 0.0
  %438 = vmatprep.subr.mxu0 0.0
  %439 = vmatpush1.msra.mxu0 0.0
  %440 = vmatprep.subr.mxu0 0.0
  %441 = vmatpush1.msra.mxu0 0.0
  %442 = vmatprep.subr.mxu0 0.0
  %443 = vmatpush1.msra.mxu0 0.0
  %444 = vmatprep.subr.mxu0 0.0
  %445 = vmatpush1.msra.mxu0 0.0
  %446 = vmatprep.subr.mxu0 0.0
  %447 = vmatpush1.msra.mxu0 0.0
  %448 = vmatprep.subr.mxu0 0.0
  %449 = vmatpush1.msra.mxu0 0.0
  %450 = vmatprep.subr.mxu0 0.0
  %451 = vmatpush1.msra.mxu0 0.0
  %452 = vmatprep.subr.mxu0 0.0
  %453 = vmatpush1.msra.mxu0 0.0
  %454 = vmatprep.subr.mxu0 0.0
  %455 = vmatpush1.msra.mxu0 0.0
  %456 = vmatprep.subr.mxu0 0.0
  %457 = vmatpush1.msra.mxu0 0.0
  %458 = vmatprep.subr.mxu0 0.0
  %459 = vmatpush1.msra.mxu0 0.0
  %460 = vmatprep.subr.mxu0 0.0
  %461 = vmatpush1.msra.mxu0 0.0
  %462 = vmatprep.subr.mxu0 0.0
  %463 = vmatpush1.msra.mxu0 0.0
  %464 = vmatprep.subr.mxu0 0.0
  %465 = vmatpush1.msra.mxu0 0.0
  %466 = vmatprep.subr.mxu0 0.0
  %467 = vmatpush1.msra.mxu0 0.0
  %468 = vmatprep.subr.mxu0 0.0
  %469 = vmatpush1.msra.mxu0 0.0
  %470 = vmatprep.subr.mxu0 0.0
  %471 = vmatpush1.msra.mxu0 0.0
  %472 = vmatprep.subr.mxu0 0.0
  %473 = vmatpush1.msra.mxu0 0.0
  %474 = vmatprep.subr.mxu0 0.0
  %475 = vmatpush1.msra.mxu0 0.0
  %476 = vmatprep.subr.mxu0 0.0
  %477 = vmatpush1.msra.mxu0 0.0
  %478 = vmatprep.mubr.f32.mxu0 0.0
  %479 = vmatmul.mubr.f32.gmra.mrb[0].mxu0 %v412
  %v480 = vpop.f32.mrb[0].mxu0
  %v481 = vadd.f32 0.0, %v480
  %v482 = vpop.f32.mrb[0].mxu0
  %483 = vdwg.mxu0
  %485 = vset.pattern.permute.xlu0 0
  %486 = vperm.xlu0 %485, %v481
  %v487 = vpop.permute.xlu0 %486
  %v489 = vmul.f32 %v77, %v487
  %v491 = vlaneseq
  %v492 = vshrl.u32 %v491, 7
  %v493 = vsub.s32 0, %v492
  %v494 = vrot.slane %v70, %v493
  %v496 = vadd.f32 %v489, %v494
  %v497 = vadd.f32 %v496, %v410
  %v499 = vsel %vm84, %v497, 0
  %501 = vmatprep.subr.mxu0 0.0
  %502 = vmatpush1.msra.mxu0 %v73
  %503 = vmatprep.subr.mxu0 0.0
  %504 = vmatpush1.msra.mxu0 %v74
  %505 = vmatprep.subr.mxu0 0.0
  %506 = vmatpush1.msra.mxu0 %v75
  %507 = vmatprep.subr.mxu0 0.0
  %508 = vmatpush1.msra.mxu0 %v76
  %509 = vmatprep.subr.mxu0 0.0
  %510 = vmatpush1.msra.mxu0 0.0
  %511 = vmatprep.subr.mxu0 0.0
  %512 = vmatpush1.msra.mxu0 0.0
  %513 = vmatprep.subr.mxu0 0.0
  %514 = vmatpush1.msra.mxu0 0.0
  %515 = vmatprep.subr.mxu0 0.0
  %516 = vmatpush1.msra.mxu0 0.0
  %517 = vmatprep.subr.mxu0 0.0
  %518 = vmatpush1.msra.mxu0 0.0
  %519 = vmatprep.subr.mxu0 0.0
  %520 = vmatpush1.msra.mxu0 0.0
  %521 = vmatprep.subr.mxu0 0.0
  %522 = vmatpush1.msra.mxu0 0.0
  %523 = vmatprep.subr.mxu0 0.0
  %524 = vmatpush1.msra.mxu0 0.0
  %525 = vmatprep.subr.mxu0 0.0
  %526 = vmatpush1.msra.mxu0 0.0
  %527 = vmatprep.subr.mxu0 0.0
  %528 = vmatpush1.msra.mxu0 0.0
  %529 = vmatprep.subr.mxu0 0.0
  %530 = vmatpush1.msra.mxu0 0.0
  %531 = vmatprep.subr.mxu0 0.0
  %532 = vmatpush1.msra.mxu0 0.0
  %533 = vmatprep.subr.mxu0 0.0
  %534 = vmatpush1.msra.mxu0 0.0
  %535 = vmatprep.subr.mxu0 0.0
  %536 = vmatpush1.msra.mxu0 0.0
  %537 = vmatprep.subr.mxu0 0.0
  %538 = vmatpush1.msra.mxu0 0.0
  %539 = vmatprep.subr.mxu0 0.0
  %540 = vmatpush1.msra.mxu0 0.0
  %541 = vmatprep.subr.mxu0 0.0
  %542 = vmatpush1.msra.mxu0 0.0
  %543 = vmatprep.subr.mxu0 0.0
  %544 = vmatpush1.msra.mxu0 0.0
  %545 = vmatprep.subr.mxu0 0.0
  %546 = vmatpush1.msra.mxu0 0.0
  %547 = vmatprep.subr.mxu0 0.0
  %548 = vmatpush1.msra.mxu0 0.0
  %549 = vmatprep.subr.mxu0 0.0
  %550 = vmatpush1.msra.mxu0 0.0
  %551 = vmatprep.subr.mxu0 0.0
  %552 = vmatpush1.msra.mxu0 0.0
  %553 = vmatprep.subr.mxu0 0.0
  %554 = vmatpush1.msra.mxu0 0.0
  %555 = vmatprep.subr.mxu0 0.0
  %556 = vmatpush1.msra.mxu0 0.0
  %557 = vmatprep.subr.mxu0 0.0
  %558 = vmatpush1.msra.mxu0 0.0
  %559 = vmatprep.subr.mxu0 0.0
  %560 = vmatpush1.msra.mxu0 0.0
  %561 = vmatprep.subr.mxu0 0.0
  %562 = vmatpush1.msra.mxu0 0.0
  %563 = vmatprep.subr.mxu0 0.0
  %564 = vmatpush1.msra.mxu0 0.0
  %565 = vmatprep.mubr.f32.mxu0 0.0
  %566 = vmatmul.mubr.f32.gmra.mrb[0].mxu0 %v499
  %v567 = vpop.f32.mrb[0].mxu0
  %v568 = vadd.f32 0.0, %v567
  %v569 = vpop.f32.mrb[0].mxu0
  %570 = vdwg.mxu0
  %v572 = vsel %vm165, %v239, 0
  %574 = vmatprep.subr.mxu0 0.0
  %575 = vmatpush1.msra.mxu0 %v71
  %576 = vmatprep.subr.mxu0 0.0
  %577 = vmatpush1.msra.mxu0 %v72
  %578 = vmatprep.subr.mxu0 0.0
  %579 = vmatpush1.msra.mxu0 0.0
  %580 = vmatprep.subr.mxu0 0.0
  %581 = vmatpush1.msra.mxu0 0.0
  %582 = vmatprep.subr.mxu0 0.0
  %583 = vmatpush1.msra.mxu0 0.0
  %584 = vmatprep.subr.mxu0 0.0
  %585 = vmatpush1.msra.mxu0 0.0
  %586 = vmatprep.subr.mxu0 0.0
  %587 = vmatpush1.msra.mxu0 0.0
  %588 = vmatprep.subr.mxu0 0.0
  %589 = vmatpush1.msra.mxu0 0.0
  %590 = vmatprep.subr.mxu0 0.0
  %591 = vmatpush1.msra.mxu0 0.0
  %592 = vmatprep.subr.mxu0 0.0
  %593 = vmatpush1.msra.mxu0 0.0
  %594 = vmatprep.subr.mxu0 0.0
  %595 = vmatpush1.msra.mxu0 0.0
  %596 = vmatprep.subr.mxu0 0.0
  %597 = vmatpush1.msra.mxu0 0.0
  %598 = vmatprep.subr.mxu0 0.0
  %599 = vmatpush1.msra.mxu0 0.0
  %600 = vmatprep.subr.mxu0 0.0
  %601 = vmatpush1.msra.mxu0 0.0
  %602 = vmatprep.subr.mxu0 0.0
  %603 = vmatpush1.msra.mxu0 0.0
  %604 = vmatprep.subr.mxu0 0.0
  %605 = vmatpush1.msra.mxu0 0.0
  %606 = vmatprep.subr.mxu0 0.0
  %607 = vmatpush1.msra.mxu0 0.0
  %608 = vmatprep.subr.mxu0 0.0
  %609 = vmatpush1.msra.mxu0 0.0
  %610 = vmatprep.subr.mxu0 0.0
  %611 = vmatpush1.msra.mxu0 0.0
  %612 = vmatprep.subr.mxu0 0.0
  %613 = vmatpush1.msra.mxu0 0.0
  %614 = vmatprep.subr.mxu0 0.0
  %615 = vmatpush1.msra.mxu0 0.0
  %616 = vmatprep.subr.mxu0 0.0
  %617 = vmatpush1.msra.mxu0 0.0
  %618 = vmatprep.subr.mxu0 0.0
  %619 = vmatpush1.msra.mxu0 0.0
  %620 = vmatprep.subr.mxu0 0.0
  %621 = vmatpush1.msra.mxu0 0.0
  %622 = vmatprep.subr.mxu0 0.0
  %623 = vmatpush1.msra.mxu0 0.0
  %624 = vmatprep.subr.mxu0 0.0
  %625 = vmatpush1.msra.mxu0 0.0
  %626 = vmatprep.subr.mxu0 0.0
  %627 = vmatpush1.msra.mxu0 0.0
  %628 = vmatprep.subr.mxu0 0.0
  %629 = vmatpush1.msra.mxu0 0.0
  %630 = vmatprep.subr.mxu0 0.0
  %631 = vmatpush1.msra.mxu0 0.0
  %632 = vmatprep.subr.mxu0 0.0
  %633 = vmatpush1.msra.mxu0 0.0
  %634 = vmatprep.subr.mxu0 0.0
  %635 = vmatpush1.msra.mxu0 0.0
  %636 = vmatprep.subr.mxu0 0.0
  %637 = vmatpush1.msra.mxu0 0.0
  %638 = vmatprep.mubr.f32.mxu0 0.0
  %639 = vmatmul.mubr.f32.gmra.mrb[0].mxu0 %v572
  %v640 = vpop.f32.mrb[0].mxu0
  %v641 = vadd.f32 %v568, %v640
  %v642 = vpop.f32.mrb[0].mxu0
  %643 = vdwg.mxu0
  %s644 = sld [smem:[#allocation2]]
  %v645 = vstv %s644
  %v646 = vadd.f32 %v641, %v645
  %vm647 = vcmask 7168
  %648 = vst.msk [vmem:[%s14] sm:$0xff] %vm647, %v646
  // Predicated region
  $region58: #{tpu_custom_call.1} parent=0 // pred_check
    _
  $region59: #{tpu_custom_call.1} parent=0 // pred_check_branch
    %650 = sbr.rel (0) target = $region61
  $region60: #{tpu_custom_call.1} parent=0 // pred_region
    _
  $region61: #{tpu_custom_call.1} parent=0 // pred_fallthru
    _
  // Predicated region
  $region62: #{tpu_custom_call.1} parent=0 // pred_check
    _
  $region63: #{tpu_custom_call.1} parent=0 // pred_check_branch
    %652 = sbr.rel (0) target = $region65
  $region64: #{tpu_custom_call.1} parent=0 // pred_region
    _
  $region65: #{tpu_custom_call.1} parent=0 // pred_fallthru
    _

</llo_original>
